<compile_context>
chip_gen: v5e
topology: v5e:2x2
jax: 0.10.0
libtpu: 0.0.40
codegen_flags: <defaults>
</compile_context>

<pallas_src>
import jax
import jax.numpy as jnp
from jax.experimental import pallas as pl
from jax.experimental.pallas import tpu as pltpu

LANES = 128


# ----------------------------- Pallas kernel ------------------------------ #
def _downconv_gemm_kernel(x_ref, w_ref, b_ref, o_ref):
    # x_ref : (TM, Kp) bf16 -- im2col patches, K = kh*kw*Cin padded to 128*n
    # w_ref : (Kp, TN) bf16 -- packed weights, Cout padded to 128*n
    # b_ref : (1,  TN) f32
    # o_ref : (TM, TN)      -- lane-dense output tile
    y = jnp.dot(x_ref[...], w_ref[...], preferred_element_type=jnp.float32)
    y = y + b_ref[...]
    # ELU (alpha=1): x if x > 0 else exp(x) - 1   (exp lands on the EUP slot)
    o_ref[...] = jnp.where(y > 0.0, y, jnp.exp(jnp.minimum(y, 0.0)) - 1.0).astype(
        o_ref.dtype
    )


# ------------------------------ tile pickers -------------------------------- #
def _round_up(x, m):
    return (x + m - 1) // m * m


def _pick_m_tile(m, kp, *, target_rows=1024, lhs_budget_bytes=2 << 20):
    """Output rows per tile: multiple of 8, bounded by a ~2 MiB bf16 LHS tile and
    `target_rows`; forced to >= 2 tiles so both v7x TensorCores get work."""
    cap = max(8, (lhs_budget_bytes // (kp * 2)) // 8 * 8)
    tm = min(target_rows, cap, _round_up(m, 8))
    if m > 8 and pl.cdiv(m, tm) < 2:
        tm = _round_up(pl.cdiv(m, 2), 8)
    return tm


def _pick_n_tile(cp, max_tn=512):
    """Largest multiple of 128 that divides cp (cp is already a multiple of 128)
    and is <= max_tn.  TODO(synk): prefer multiples of 256 on v6e/v7x MXUs when
    Cout > 128."""
    tn = min(cp, max_tn)
    while cp % tn:
        tn -= LANES
    return tn


# ------------------------------ JAX wrapper -------------------------------- #
def down_conv(x_nchw, w_hwio, bias, *, stride=2, pad=1, out_dtype=jnp.float32):
    """elu(conv2d(x, w, stride=2, padding=1)) -- matches torch DownConv.forward.

    x_nchw : (N, Cin, H, W)      -- torch NCHW input
    w_hwio : (kh, kw, Cin, Cout) -- conv weight (HWIO)
    bias   : (Cout,)
    returns: (N, Cout, Ho, Wo)   -- torch NCHW output (out_dtype, default f32)
    """
    N, Cin, H, W = x_nchw.shape
    kh, kw, _, Cout = w_hwio.shape
    assert stride == 2 and pad == 1 and kh == 3 and kw == 3, "DownConv spec"
    Ho = (H + 2 * pad - kh) // stride + 1
    Wo = (W + 2 * pad - kw) // stride + 1

    K9 = kh * kw * Cin
    Kp = LANES * pl.cdiv(K9, LANES)      # lane-dense padded contraction dim
    Cp = LANES * pl.cdiv(Cout, LANES)    # lane-dense padded output channels
    M = N * Ho * Wo

    # Wrapper-side packing (XLA layout work, no compute): im2col the 9 stride-2
    # taps into a lane-dense (M, Kp) LHS so the kernel's loads are dense and
    # reshape-free.
    x = jnp.transpose(x_nchw, (0, 2, 3, 1))                     # NHWC
    x_pad = jnp.pad(x, ((0, 0), (pad, pad), (pad, pad), (0, 0)))
    taps = [
        x_pad[:, ih::2, iw::2, :][:, :Ho, :Wo, :]
        for ih in range(kh)
        for iw in range(kw)
    ]
    patches = jnp.stack(taps, axis=3).reshape(M, K9)            # (M, 9*Cin)

    TM = _pick_m_tile(M, Kp)
    TN = _pick_n_tile(Cp)
    Mp = TM * pl.cdiv(M, TM)

    lhs = jnp.pad(patches, ((0, Mp - M), (0, Kp - K9))).astype(jnp.bfloat16)
    rhs = jnp.pad(
        w_hwio.reshape(K9, Cout), ((0, Kp - K9), (0, Cp - Cout))
    ).astype(jnp.bfloat16)
    b_row = jnp.pad(bias.reshape(1, Cout), ((0, 0), (0, Cp - Cout))).astype(
        jnp.float32
    )

    out_flat = pl.pallas_call(
        _downconv_gemm_kernel,
        out_shape=jax.ShapeDtypeStruct((Mp, Cp), out_dtype),
        grid_spec=pltpu.PrefetchScalarGridSpec(
            num_scalar_prefetch=0,
            grid=(Mp // TM, Cp // TN),
            in_specs=[
                pl.BlockSpec((TM, Kp), lambda i, j: (i, 0)),
                pl.BlockSpec((Kp, TN), lambda i, j: (0, j)),
                pl.BlockSpec((1, TN), lambda i, j: (0, j)),
            ],
            out_specs=pl.BlockSpec((TM, TN), lambda i, j: (i, j)),
        ),
        compiler_params=pltpu.CompilerParams(
            dimension_semantics=("parallel", "parallel"),
        ),
    )(lhs, rhs, b_row)

    # TODO(synk): keep the activation channels-last (and/or bf16) end-to-end to
    # skip this extra full-output slice + transpose pass; kept to preserve the
    # torch module's NCHW interface.
    out = out_flat[:M, :Cout].reshape(N, Ho, Wo, Cout)
    return jnp.transpose(out, (0, 3, 1, 2))


# ------------------------------ reference ---------------------------------- #
def down_conv_ref(x_nchw, w_hwio, bias, *, stride=2, pad=1):
    y = jax.lax.conv_general_dilated(
        x_nchw.astype(jnp.float32),
        w_hwio.astype(jnp.float32),
        window_strides=(stride, stride),
        padding=((pad, pad), (pad, pad)),
        dimension_numbers=("NCHW", "HWIO", "NCHW"),
    ) + bias.reshape(1, -1, 1, 1)
    return jnp.where(y > 0.0, y, jnp.exp(jnp.minimum(y, 0.0)) - 1.0)


# --------------------------------- main ------------------------------------ #
if __name__ == "__main__":
    key = jax.random.PRNGKey(0)
    k_x, k_w, k_b = jax.random.split(key, 3)

    N, Cin, H, W = 2, 4, 16, 16
    Cout, K = 8, 3

    x = jax.random.normal(k_x, (N, Cin, H, W), dtype=jnp.float32)
    fan_in = Cin * K * K
    bound = 1.0 / (fan_in ** 0.5)
    w_hwio = jax.random.uniform(k_w, (K, K, Cin, Cout), jnp.float32, -bound, bound)
    bias = jax.random.uniform(k_b, (Cout,), jnp.float32, -bound, bound)

    # Round x / w to bf16 values (the kernel feeds the MXU in bf16) so the f32
    # reference sees identical operand values and the check stays tight.
    x_q = x.astype(jnp.bfloat16).astype(jnp.float32)
    w_q = w_hwio.astype(jnp.bfloat16).astype(jnp.float32)

    out = jax.block_until_ready(down_conv(x_q, w_q, bias))
    ref = down_conv_ref(x_q, w_q, bias)

    assert out.shape == (N, Cout, H // 2, W // 2), out.shape
    assert jnp.allclose(out, ref, atol=1e-3, rtol=1e-3), \
        float(jnp.max(jnp.abs(out - ref)))

    print("KERNEL_OK")
</pallas_src>

<mosaic_0001>
module attributes {stable_mosaic.version = 11 : i64} {
  func.func @_downconv_gemm_kernel(%arg0: i32, %arg1: i32, %arg2: memref<64x128xbf16, #tpu.memory_space<vmem>>, %arg3: memref<128x128xbf16, #tpu.memory_space<vmem>>, %arg4: memref<1x128xf32, #tpu.memory_space<vmem>>, %arg5: memref<64x128xf32, #tpu.memory_space<vmem>>) attributes {dimension_semantics = [#tpu.dimension_semantics<parallel>, #tpu.dimension_semantics<parallel>], iteration_bounds = array<i64: 2, 1>, scalar_prefetch = 0 : i64, scratch_operands = 0 : i64, tpu.core_type = #tpu.core_type<tc>, window_params = [{transform_indices = @transform_0, window_bounds = array<i64: 64, 128>}, {transform_indices = @transform_1, window_bounds = array<i64: 128, 128>}, {transform_indices = @transform_2, window_bounds = array<i64: 1, 128>}, {transform_indices = @transform_3, window_bounds = array<i64: 64, 128>}]} {
    %c0 = arith.constant 0 : index
    %c0_0 = arith.constant 0 : index
    %0 = vector.load %arg2[%c0, %c0_0] : memref<64x128xbf16, #tpu.memory_space<vmem>>, vector<64x128xbf16>
    %c0_1 = arith.constant 0 : index
    %c0_2 = arith.constant 0 : index
    %1 = vector.load %arg3[%c0_1, %c0_2] : memref<128x128xbf16, #tpu.memory_space<vmem>>, vector<128x128xbf16>
    %cst = arith.constant dense<0.000000e+00> : vector<64x128xf32>
    %2 = tpu.matmul %0, %1, %cst {dimension_numbers = #tpu.dot_dimension_numbers<[1], [0], [0], [1], [0, 0, 1, 1], [], []>} : vector<64x128xbf16>, vector<128x128xbf16>, vector<64x128xf32> -> vector<64x128xf32>
    %c0_3 = arith.constant 0 : index
    %c0_4 = arith.constant 0 : index
    %3 = vector.load %arg4[%c0_3, %c0_4] : memref<1x128xf32, #tpu.memory_space<vmem>>, vector<1x128xf32>
    %4 = vector.broadcast %3 : vector<1x128xf32> to vector<64x128xf32>
    %5 = arith.addf %2, %4 : vector<64x128xf32>
    %cst_5 = arith.constant 0.000000e+00 : f32
    %6 = vector.broadcast %cst_5 : f32 to vector<64x128xf32>
    %7 = arith.cmpf ogt, %5, %6 : vector<64x128xf32>
    %cst_6 = arith.constant 0.000000e+00 : f32
    %8 = vector.broadcast %cst_6 : f32 to vector<64x128xf32>
    %9 = arith.minimumf %5, %8 : vector<64x128xf32>
    %10 = math.exp %9 : vector<64x128xf32>
    %cst_7 = arith.constant 1.000000e+00 : f32
    %11 = vector.broadcast %cst_7 : f32 to vector<64x128xf32>
    %12 = arith.subf %10, %11 : vector<64x128xf32>
    %13 = arith.select %7, %5, %12 : vector<64x128xi1>, vector<64x128xf32>
    %c0_8 = arith.constant 0 : index
    %c0_9 = arith.constant 0 : index
    %14 = vector.load %arg5[%c0_8, %c0_9] : memref<64x128xf32, #tpu.memory_space<vmem>>, vector<64x128xf32>
    tpu.vector_store %arg5[%c0_8, %c0_9], %13 {strides = array<i32>} : memref<64x128xf32, #tpu.memory_space<vmem>>, vector<64x128xf32>,
    return
  }
  func.func @transform_0(%arg0: i32, %arg1: i32) -> (i32, i32) {
    %c0_i32 = arith.constant 0 : i32
    %c0_i32_0 = arith.constant 0 : i32
    return %arg0, %c0_i32 : i32, i32
  }
  func.func @transform_1(%arg0: i32, %arg1: i32) -> (i32, i32) {
    %c0_i32 = arith.constant 0 : i32
    %c0_i32_0 = arith.constant 0 : i32
    return %c0_i32, %arg1 : i32, i32
  }
  func.func @transform_2(%arg0: i32, %arg1: i32) -> (i32, i32) {
    %c0_i32 = arith.constant 0 : i32
    %c0_i32_0 = arith.constant 0 : i32
    return %c0_i32, %arg1 : i32, i32
  }
  func.func @transform_3(%arg0: i32, %arg1: i32) -> (i32, i32) {
    %c0_i32 = arith.constant 0 : i32
    return %arg0, %arg1 : i32, i32
  }
}

</mosaic_0001>

<llo_original>
// kernel: tpu_custom_call.1
$region0: #{tpu_custom_call.1}
  #allocation0 [shape = 'u32[]', space=smem, size = 0x4, offset = 0x4, fixed_abs, tag = 'smem constant byte address 0x4 - core index']
  #allocation1 [shape = 'u32[72,128]{1,0:T(1,128)}', space=vmem, size = 0x9000, scoped, tag = 'internal scratch']
  %s0 = inlined_call_operand.hbm [shape: bf16[128,128], index: 0, kind: input, shape index: {}]
  %s1 = inlined_call_operand.hbm [shape: bf16[128,128], index: 1, kind: input, shape index: {}]
  %s2 = inlined_call_operand.vmem [shape: f32[1,128], index: 2, kind: input, shape index: {}]
  %s3 = inlined_call_operand.hbm [shape: f32[128,128], index: 3, kind: output, shape index: {}]
  %s4 = sld [smem:[#allocation0]]
  $region53: #{tpu_custom_call.1} parent=0
    _
  %s6 = ssub.s32 1, %s4
  %s7 = scalar_select 0, %s6, %s4
  $region1: #{tpu_custom_call.1} parent=0
    #allocation2 [shape = 'u8[32768]{0}', space=vmem, size = 0x8000, scoped, tag = 'input window, operand 0']
    #allocation3 [shape = 's32[2]{0}', space=sflag, size = 0x8, scoped, tag = 'scoped memory for tpu_custom_call.1']
    #allocation4 [shape = 's32[2]{0}', space=sflag, size = 0x8, scoped, tag = 'scoped memory for tpu_custom_call.1']
    #allocation5 [shape = 'u8[32768]{0}', space=vmem, size = 0x8000, scoped, tag = 'input window, operand 1, single buffered']
    #allocation6 [shape = 's32[1]{0}', space=sflag, size = 0x4, scoped, tag = 'scoped memory for tpu_custom_call.1']
    #allocation7 [shape = 'u8[65536]{0}', space=vmem, size = 0x10000, scoped, tag = 'output window, operand 0']
    %8 = vsyncpa [#allocation3], 0
    %s9 = scalar_lea.sflag [#allocation3], 1
    %10 = vsyncpa %s9, 0
    %11 = vsyncpa [#allocation6], 0
    %12 = vsyncpa [#allocation4], 0
    %s13 = scalar_lea.sflag [#allocation4], 1
    %14 = vsyncpa %s13, 0
    loop: start=0, step=1, limit=4
    $region2: #{tpu_custom_call.1} parent=1 // loop_pre_header
      _
    $region3: #{tpu_custom_call.1} parent=1 // loop_header
      %s16 = sphi 0, %s20
      %p17 = scmp.ge.s32.totalorder %s16, 4
      %s23 = sphi 0, %s35
      %s24 = sphi 0, %s31
      %s25 = sphi 0, %s23
      %s26 = sphi 0, %s24
      %s27 = sphi 0, %s25
      %s28 = sphi 0, %s26
      %s38 = sphi 0, %s40
      %s41 = sphi 0, %s38
      %s42 = sphi 0, %s41
      %s58 = sphi 0, %s42
      %s64 = sphi 0, %s66
      %s67 = sphi 0, %s64
      %s68 = sphi 0, %s67
      %s84 = sphi 0, %s68
      %s90 = sphi 0, %s92
      %s93 = sphi 0, %s90
      %s94 = sphi 0, %s93
      %s110 = sphi 0, %s94
      %s118 = sphi 0, %s120
      %s121 = sphi 0, %s118
      %s122 = sphi 0, %s121
      %s138 = sphi 0, %s122
    $region4: #{tpu_custom_call.1} parent=1 // loop_header_branch
      %19 = sbr.rel (%p17) target = $region8
    $region5: #{tpu_custom_call.1} parent=1 // loop_body
      %s21 = ssub.s32 %s16, 1
      %s22 = ssub.s32 %s16, 2
      %s29 = sadd.s32 1, %s24
      %p30 = scmp.ge.s32.totalorder %s29, 1
      %s31 = scalar_select %p30, 0, %s29
      %s32 = sadd.s32 1, %s23
      %s33 = scalar_select %p30, %s32, %s23
      %p34 = scmp.ge.s32.totalorder %s33, 2
      %s35 = scalar_select %p34, 0, %s33
      %s36 = ssub.s32 %s23, %s35
      %p37 = scmp.eq.s32.totalorder %s36, 0
      %s39 = sadd.s32 %s38, 1
      %s40 = scalar_select %p37, %s38, %s39
      %p43 = pneg %p37
      %p44 = scmp.eq.s32.totalorder %s16, 1
      %p45 = por %p43, %p44
      %p46 = scmp.ne.s32.totalorder %s38, %s41
      %p47 = scmp.eq.s32.totalorder %s16, 0
      %p48 = por %p46, %p47
      %p49 = scmp.ne.s32.totalorder %s38, %s41
      %p50 = scmp.eq.s32.totalorder %s21, 1
      %p51 = por %p49, %p50
      %p52 = scmp.ne.s32.totalorder %s41, %s42
      %p53 = scmp.eq.s32.totalorder %s21, 0
      %p54 = por %p52, %p53
      %p55 = scmp.ne.s32.totalorder %s41, %s42
      %p56 = scmp.eq.s32.totalorder %s22, 1
      %p57 = por %p55, %p56
      %p59 = scmp.ne.s32.totalorder %s42, %s58
      %p60 = scmp.eq.s32.totalorder %s22, 0
      %p61 = por %p59, %p60
      %s62 = ssub.s32 %s24, %s31
      %p63 = scmp.eq.s32.totalorder %s62, 0
      %s65 = sadd.s32 %s64, 1
      %s66 = scalar_select %p63, %s64, %s65
      %p69 = pneg %p63
      %p70 = scmp.eq.s32.totalorder %s16, 1
      %p71 = por %p69, %p70
      %p72 = scmp.ne.s32.totalorder %s64, %s67
      %p73 = scmp.eq.s32.totalorder %s16, 0
      %p74 = por %p72, %p73
      %p75 = scmp.ne.s32.totalorder %s64, %s67
      %p76 = scmp.eq.s32.totalorder %s21, 1
      %p77 = por %p75, %p76
      %p78 = scmp.ne.s32.totalorder %s67, %s68
      %p79 = scmp.eq.s32.totalorder %s21, 0
      %p80 = por %p78, %p79
      %p81 = scmp.ne.s32.totalorder %s67, %s68
      %p82 = scmp.eq.s32.totalorder %s22, 1
      %p83 = por %p81, %p82
      %p85 = scmp.ne.s32.totalorder %s68, %s84
      %p86 = scmp.eq.s32.totalorder %s22, 0
      %p87 = por %p85, %p86
      %s88 = ssub.s32 %s24, %s31
      %p89 = scmp.eq.s32.totalorder %s88, 0
      %s91 = sadd.s32 %s90, 1
      %s92 = scalar_select %p89, %s90, %s91
      %p95 = pneg %p89
      %p96 = scmp.eq.s32.totalorder %s16, 1
      %p97 = por %p95, %p96
      %p98 = scmp.ne.s32.totalorder %s90, %s93
      %p99 = scmp.eq.s32.totalorder %s16, 0
      %p100 = por %p98, %p99
      %p101 = scmp.ne.s32.totalorder %s90, %s93
      %p102 = scmp.eq.s32.totalorder %s21, 1
      %p103 = por %p101, %p102
      %p104 = scmp.ne.s32.totalorder %s93, %s94
      %p105 = scmp.eq.s32.totalorder %s21, 0
      %p106 = por %p104, %p105
      %p107 = scmp.ne.s32.totalorder %s93, %s94
      %p108 = scmp.eq.s32.totalorder %s22, 1
      %p109 = por %p107, %p108
      %p111 = scmp.ne.s32.totalorder %s94, %s110
      %p112 = scmp.eq.s32.totalorder %s22, 0
      %p113 = por %p111, %p112
      %s114 = ssub.s32 %s23, %s35
      %s115 = ssub.s32 %s24, %s31
      %s116 = sor.u32 %s114, %s115
      %p117 = scmp.eq.s32.totalorder %s116, 0
      %s119 = sadd.s32 %s118, 1
      %s120 = scalar_select %p117, %s118, %s119
      %p123 = pneg %p117
      %p124 = scmp.eq.s32.totalorder %s16, 1
      %p125 = por %p123, %p124
      %p126 = scmp.ne.s32.totalorder %s118, %s121
      %p127 = scmp.eq.s32.totalorder %s16, 0
      %p128 = por %p126, %p127
      %p129 = scmp.ne.s32.totalorder %s118, %s121
      %p130 = scmp.eq.s32.totalorder %s21, 1
      %p131 = por %p129, %p130
      %p132 = scmp.ne.s32.totalorder %s121, %s122
      %p133 = scmp.eq.s32.totalorder %s21, 0
      %p134 = por %p132, %p133
      %p135 = scmp.ne.s32.totalorder %s121, %s122
      %p136 = scmp.eq.s32.totalorder %s22, 1
      %p137 = por %p135, %p136
      %p139 = scmp.ne.s32.totalorder %s122, %s138
      %p140 = scmp.eq.s32.totalorder %s22, 0
      %p141 = por %p139, %p140
      %p142 = scmp.le.s32.totalorder 1, %s16
      %p143 = scmp.lt.s32.totalorder %s16, 3
      %p144 = pnand %p142, %p143
      %p145 = pneg %p144
      // Predicated region
      $region9: #{tpu_custom_call.1} parent=5 // pred_check
        _
      $region10: #{tpu_custom_call.1} parent=5 // pred_check_branch
        %147 = sbr.rel (%p144) target = $region12
      $region11: #{tpu_custom_call.1} parent=5 // pred_region
        %s148 = ssub.s32 %s16, 1
        // Predicated region
        $region13: #{tpu_custom_call.1} parent=11 // pred_check
          %p149 = pneg %p80
        $region14: #{tpu_custom_call.1} parent=11 // pred_check_branch
          %151 = sbr.rel (%p149) target = $region16
        $region15: #{tpu_custom_call.1} parent=11 // pred_region
          %153 = vsyncadd [#allocation6], 0
          %s154 = smul.addr %s26, 4
          %s155 = scalar_lea.hbm %s1, %s154
          %s156 = sshll.u32 %s155, 4
          %s157 = int_to_ptr.hbm [resolvable:$true] %s156
          %s158 = sshll.u32 [#allocation5], 4
          %s159 = int_to_ptr.vmem [resolvable:$true] %s158
          %164 = dma.hbm_to_vmem [thread:$0]  %s157, 1024, %s159, [#allocation6], 64, 64, 4
        $region16: #{tpu_custom_call.1} parent=11 // pred_fallthru
          _
        // Predicated region
        $region17: #{tpu_custom_call.1} parent=11 // pred_check
          %p165 = pneg %p106
        $region18: #{tpu_custom_call.1} parent=11 // pred_check_branch
          %167 = sbr.rel (%p165) target = $region20
        $region19: #{tpu_custom_call.1} parent=11 // pred_region
          %p168 = scmp.lt.s32.totalorder %s26, 0
          %s169 = scalar_select %p168, %s26, 0
          %s170 = scalar_lea.vmem %s2, %s169
        $region20: #{tpu_custom_call.1} parent=11 // pred_fallthru
          _
      $region12: #{tpu_custom_call.1} parent=5 // pred_fallthru
        _
      %p171 = scmp.lt.s32.totalorder %s16, 2
      // Predicated region
      $region21: #{tpu_custom_call.1} parent=5 // pred_check
        %p172 = pneg %p171
      $region22: #{tpu_custom_call.1} parent=5 // pred_check_branch
        %174 = sbr.rel (%p172) target = $region24
      $region23: #{tpu_custom_call.1} parent=5 // pred_region
        // Predicated region
        $region25: #{tpu_custom_call.1} parent=23 // pred_check
          %p175 = pneg %p48
        $region26: #{tpu_custom_call.1} parent=23 // pred_check_branch
          %177 = sbr.rel (%p175) target = $region28
        $region27: #{tpu_custom_call.1} parent=23 // pred_region
          %s178 = sand.u32 %s38, 1
          %s179 = scalar_lea.sflag [#allocation3], %s178
          %s180 = sand.u32 %s38, 1
          %s181 = smul.addr %s180, 32
          %s182 = scalar_lea.vmem [#allocation2], %s181
          %s183 = smul.u32 8, %s23
          %185 = vsyncadd %s179, 0
          %s186 = smul.addr %s183, 4
          %s187 = scalar_lea.hbm %s0, %s186
          %s188 = sshll.u32 %s187, 4
          %s189 = int_to_ptr.hbm [resolvable:$true] %s188
          %s190 = sshll.u32 %s182, 4
          %s191 = int_to_ptr.vmem [resolvable:$true] %s190
          %196 = dma.hbm_to_vmem [thread:$0]  %s189, 512, %s191, %s179, 64, 64, 4
        $region28: #{tpu_custom_call.1} parent=23 // pred_fallthru
          _
      $region24: #{tpu_custom_call.1} parent=5 // pred_fallthru
        _
      %p197 = scmp.le.s32.totalorder 1, %s16
      %p198 = scmp.lt.s32.totalorder %s16, 3
      %p199 = pnand %p197, %p198
      %p200 = pneg %p199
      // Predicated region
      $region29: #{tpu_custom_call.1} parent=5 // pred_check
        _
      $region30: #{tpu_custom_call.1} parent=5 // pred_check_branch
        %202 = sbr.rel (%p199) target = $region32
      $region31: #{tpu_custom_call.1} parent=5 // pred_region
        %s203 = ssub.s32 %s16, 1
        %s204 = sand.u32 %s41, 1
        %s205 = scalar_lea.sflag [#allocation3], %s204
        %s206 = sand.u32 %s41, 1
        %s207 = smul.addr %s206, 32
        %s208 = scalar_lea.vmem [#allocation2], %s207
        // Predicated region
        $region33: #{tpu_custom_call.1} parent=31 // pred_check
          %p209 = pneg %p54
        $region34: #{tpu_custom_call.1} parent=31 // pred_check_branch
          %211 = sbr.rel (%p209) target = $region36
        $region35: #{tpu_custom_call.1} parent=31 // pred_region
          %213 = dma.done %s205, 512
        $region36: #{tpu_custom_call.1} parent=31 // pred_fallthru
          _
        // Predicated region
        $region37: #{tpu_custom_call.1} parent=31 // pred_check
          %p214 = pneg %p80
        $region38: #{tpu_custom_call.1} parent=31 // pred_check_branch
          %216 = sbr.rel (%p214) target = $region40
        $region39: #{tpu_custom_call.1} parent=31 // pred_region
          %218 = dma.done [#allocation6], 1024
        $region40: #{tpu_custom_call.1} parent=31 // pred_fallthru
          _
        %s219 = sand.u32 %s41, 1
        %s220 = scalar_lea.sflag [#allocation3], %s219
        %s221 = sand.u32 %s41, 1
        %s222 = smul.addr %s221, 32
        %s223 = scalar_lea.vmem [#allocation2], %s222
        %p224 = pneg %p54
        %p225 = pneg %p51
        %p226 = pneg %p80
        %p227 = pneg %p77
        %p228 = scmp.lt.s32.totalorder %s26, 0
        %s229 = scalar_select %p228, %s26, 0
        %s230 = scalar_lea.vmem %s2, %s229
        %p231 = pneg %p106
        %p232 = pneg %p103
        %p233 = pneg %p134
        %p234 = pneg %p131
        %s235 = sand.u32 %s121, 1
        %s236 = scalar_lea.sflag [#allocation4], %s235
        %s237 = sand.u32 %s121, 1
        %s238 = smul.addr %s237, 64
        %s239 = scalar_lea.vmem [#allocation7], %s238
        %s240 = smul.u32 8, %s25
        %p241 = scmp.lt.s32.totalorder %s26, 0
        %s242 = scalar_select %p241, %s26, 0
        %s243 = scalar_lea.vmem %s2, %s242
        %s244 = smul.u32 8, %s25
        %v245 = vld [vmem:[%s208] sm:$0xf]
        %v246 = vld [vmem:[%s208 + $0x4] sm:$0xf]
        %v247 = vld [vmem:[%s208 + $0x8] sm:$0xf]
        %v248 = vld [vmem:[%s208 + $0xc] sm:$0xf]
        %v249 = vld [vmem:[%s208 + $0x10] sm:$0xf]
        %v250 = vld [vmem:[%s208 + $0x14] sm:$0xf]
        %v251 = vld [vmem:[%s208 + $0x18] sm:$0xf]
        %v252 = vld [vmem:[%s208 + $0x1c] sm:$0xf]
        %v253 = vld [vmem:[#allocation5] sm:$0xf]
        %v254 = vld [vmem:[#allocation5 + $0x4] sm:$0xf]
        %v255 = vld [vmem:[#allocation5 + $0x8] sm:$0xf]
        %v256 = vld [vmem:[#allocation5 + $0xc] sm:$0xf]
        %v257 = vld [vmem:[#allocation5 + $0x10] sm:$0xf]
        %v258 = vld [vmem:[#allocation5 + $0x14] sm:$0xf]
        %v259 = vld [vmem:[#allocation5 + $0x18] sm:$0xf]
        %v260 = vld [vmem:[#allocation5 + $0x1c] sm:$0xf]
        %v261 = vld [vmem:[#allocation5 + $0x20] sm:$0xf]
        %v262 = vld [vmem:[#allocation5 + $0x24] sm:$0xf]
        %v263 = vld [vmem:[#allocation5 + $0x28] sm:$0xf]
        %v264 = vld [vmem:[#allocation5 + $0x2c] sm:$0xf]
        %v265 = vld [vmem:[#allocation5 + $0x30] sm:$0xf]
        %v266 = vld [vmem:[#allocation5 + $0x34] sm:$0xf]
        %v267 = vld [vmem:[#allocation5 + $0x38] sm:$0xf]
        %v268 = vld [vmem:[#allocation5 + $0x3c] sm:$0xf]
        %v269 = vld [vmem:[%s243] sm:$0x1]
        %v271 = vperm.slane %v269, 0
        %v281 = vunpack.c.l.b16 %v245
        %v282 = vunpack.c.l.b16 %v246
        %v283 = vunpack.c.l.b16 %v247
        %v284 = vunpack.c.l.b16 %v248
        %v285 = vunpack.c.l.b16 %v249
        %v286 = vunpack.c.l.b16 %v250
        %v287 = vunpack.c.l.b16 %v251
        %v288 = vunpack.c.l.b16 %v252
        %v289 = vpack.c.b16 %v282, %v281
        %v290 = vpack.c.b16 %v284, %v283
        %v291 = vpack.c.b16 %v286, %v285
        %v292 = vpack.c.b16 %v288, %v287
        %v313 = vunpack.c.l.b16 %v253
        %v314 = vunpack.c.l.b16 %v254
        %v315 = vunpack.c.l.b16 %v255
        %v316 = vunpack.c.l.b16 %v256
        %v317 = vunpack.c.l.b16 %v257
        %v318 = vunpack.c.l.b16 %v258
        %v319 = vunpack.c.l.b16 %v259
        %v320 = vunpack.c.l.b16 %v260
        %v321 = vunpack.c.l.b16 %v261
        %v322 = vunpack.c.l.b16 %v262
        %v323 = vunpack.c.l.b16 %v263
        %v324 = vunpack.c.l.b16 %v264
        %v325 = vunpack.c.l.b16 %v265
        %v326 = vunpack.c.l.b16 %v266
        %v327 = vunpack.c.l.b16 %v267
        %v328 = vunpack.c.l.b16 %v268
        %v329 = vpack.c.b16 %v314, %v313
        %v330 = vpack.c.b16 %v316, %v315
        %v331 = vpack.c.b16 %v318, %v317
        %v332 = vpack.c.b16 %v320, %v319
        %v333 = vpack.c.b16 %v322, %v321
        %v334 = vpack.c.b16 %v324, %v323
        %v335 = vpack.c.b16 %v326, %v325
        %v336 = vpack.c.b16 %v328, %v327
        %345 = vmatpush.bf16.msra.mxu0 %v336
        %346 = vmatpush.bf16.msra.mxu0 %v335
        %347 = vmatpush.bf16.msra.mxu0 %v334
        %348 = vmatpush.bf16.msra.mxu0 %v333
        %349 = vmatpush.bf16.msra.mxu0 %v332
        %350 = vmatpush.bf16.msra.mxu0 %v331
        %351 = vmatpush.bf16.msra.mxu0 %v330
        %352 = vmatpush.bf16.msra.mxu0 %v329
        %353 = vmatmul.bf16.gmra.mxu0 %v289
        %v354 = vpop.f32.mrf.mxu0
        %v355 = vadd.f32 %v271, %v354
        %v356 = vpop.f32.mrf.mxu0
        %v357 = vadd.f32 %v271, %v356
        %358 = vmatmul.bf16.gmra.mxu0 %v290
        %v359 = vpop.f32.mrf.mxu0
        %v360 = vadd.f32 %v271, %v359
        %v361 = vpop.f32.mrf.mxu0
        %v362 = vadd.f32 %v271, %v361
        %363 = vmatmul.bf16.gmra.mxu0 %v291
        %v364 = vpop.f32.mrf.mxu0
        %v365 = vadd.f32 %v271, %v364
        %v366 = vpop.f32.mrf.mxu0
        %v367 = vadd.f32 %v271, %v366
        %368 = vmatmul.bf16.gmra.mxu0 %v292
        %v369 = vpop.f32.mrf.mxu0
        %v370 = vadd.f32 %v271, %v369
        %v371 = vpop.f32.mrf.mxu0
        %v372 = vadd.f32 %v271, %v371
        %373 = vdwg.mxu0
        %vm374 = vcmp.gt.f32.partialorder %v355, 0.0
        %vm375 = vcmp.gt.f32.partialorder %v357, 0.0
        %vm376 = vcmp.gt.f32.partialorder %v360, 0.0
        %vm377 = vcmp.gt.f32.partialorder %v362, 0.0
        %vm378 = vcmp.gt.f32.partialorder %v365, 0.0
        %vm379 = vcmp.gt.f32.partialorder %v367, 0.0
        %vm380 = vcmp.gt.f32.partialorder %v370, 0.0
        %vm381 = vcmp.gt.f32.partialorder %v372, 0.0
        %v382 = vmin.f32 %v355, 0.0
        %v383 = vmin.f32 %v357, 0.0
        %v384 = vmin.f32 %v360, 0.0
        %v385 = vmin.f32 %v362, 0.0
        %v386 = vmin.f32 %v365, 0.0
        %v387 = vmin.f32 %v367, 0.0
        %v388 = vmin.f32 %v370, 0.0
        %v389 = vmin.f32 %v372, 0.0
        %v390 = vmul.f32 %v382, 1.442695
        %v391 = vpow.pop %v390
        %v392 = vmul.f32 %v383, 1.442695
        %v393 = vpow.pop %v392
        %v394 = vmul.f32 %v384, 1.442695
        %v395 = vpow.pop %v394
        %v396 = vmul.f32 %v385, 1.442695
        %v397 = vpow.pop %v396
        %v398 = vmul.f32 %v386, 1.442695
        %v399 = vpow.pop %v398
        %v400 = vmul.f32 %v387, 1.442695
        %v401 = vpow.pop %v400
        %v402 = vmul.f32 %v388, 1.442695
        %v403 = vpow.pop %v402
        %v404 = vmul.f32 %v389, 1.442695
        %v405 = vpow.pop %v404
        %v406 = vsub.f32 %v391, 1.0
        %v407 = vsub.f32 %v393, 1.0
        %v408 = vsub.f32 %v395, 1.0
        %v409 = vsub.f32 %v397, 1.0
        %v410 = vsub.f32 %v399, 1.0
        %v411 = vsub.f32 %v401, 1.0
        %v412 = vsub.f32 %v403, 1.0
        %v413 = vsub.f32 %v405, 1.0
        %v414 = vsel %vm374, %v355, %v406
        %v415 = vsel %vm375, %v357, %v407
        %v416 = vsel %vm376, %v360, %v408
        %v417 = vsel %vm377, %v362, %v409
        %v418 = vsel %vm378, %v365, %v410
        %v419 = vsel %vm379, %v367, %v411
        %v420 = vsel %vm380, %v370, %v412
        %v421 = vsel %vm381, %v372, %v413
        %422 = vst [vmem:[%s239] sm:$0xff] %v414
        %423 = vst [vmem:[%s239 + $0x8] sm:$0xff] %v415
        %424 = vst [vmem:[%s239 + $0x10] sm:$0xff] %v416
        %425 = vst [vmem:[%s239 + $0x18] sm:$0xff] %v417
        %426 = vst [vmem:[%s239 + $0x20] sm:$0xff] %v418
        %427 = vst [vmem:[%s239 + $0x28] sm:$0xff] %v419
        %428 = vst [vmem:[%s239 + $0x30] sm:$0xff] %v420
        %429 = vst [vmem:[%s239 + $0x38] sm:$0xff] %v421
        %s430 = sand.u32 %s121, 1
        %s431 = scalar_lea.sflag [#allocation4], %s430
        %s432 = sand.u32 %s121, 1
        %s433 = smul.addr %s432, 64
        %s434 = scalar_lea.vmem [#allocation7], %s433
        // Predicated region
        $region41: #{tpu_custom_call.1} parent=31 // pred_check
          %p435 = pneg %p131
        $region42: #{tpu_custom_call.1} parent=31 // pred_check_branch
          %437 = sbr.rel (%p435) target = $region44
        $region43: #{tpu_custom_call.1} parent=31 // pred_region
          %s438 = smul.u32 8, %s25
          %440 = vsyncadd %s431, 0
          %s441 = sadd.s32 %s26, %s438
          %s442 = smul.addr %s441, 8
          %s443 = scalar_lea.hbm %s3, %s442
          %s444 = sshll.u32 %s434, 4
          %s445 = int_to_ptr.vmem [resolvable:$true] %s444
          %s446 = sshll.u32 %s443, 4
          %s447 = int_to_ptr.hbm [resolvable:$true] %s446
          %452 = dma.vmem_to_hbm [thread:$0]  %s445, 1024, %s447, %s431, 128, 128, 8
        $region44: #{tpu_custom_call.1} parent=31 // pred_fallthru
          _
      $region32: #{tpu_custom_call.1} parent=5 // pred_fallthru
        _
      %p453 = scmp.le.s32.totalorder 2, %s16
      // Predicated region
      $region45: #{tpu_custom_call.1} parent=5 // pred_check
        %p454 = pneg %p453
      $region46: #{tpu_custom_call.1} parent=5 // pred_check_branch
        %456 = sbr.rel (%p454) target = $region48
      $region47: #{tpu_custom_call.1} parent=5 // pred_region
        %s457 = ssub.s32 %s16, 2
        // Predicated region
        $region49: #{tpu_custom_call.1} parent=47 // pred_check
          %p458 = pneg %p137
        $region50: #{tpu_custom_call.1} parent=47 // pred_check_branch
          %460 = sbr.rel (%p458) target = $region52
        $region51: #{tpu_custom_call.1} parent=47 // pred_region
          %s461 = sand.u32 %s122, 1
          %s462 = scalar_lea.sflag [#allocation4], %s461
          %s463 = sand.u32 %s122, 1
          %s464 = smul.addr %s463, 64
          %s465 = scalar_lea.vmem [#allocation7], %s464
          %467 = dma.done %s462, 1024
        $region52: #{tpu_custom_call.1} parent=47 // pred_fallthru
          _
      $region48: #{tpu_custom_call.1} parent=5 // pred_fallthru
        _
    $region6: #{tpu_custom_call.1} parent=1 // loop_footer
      %s20 = sadd.s32 1, %s16
    $region7: #{tpu_custom_call.1} parent=1 // loop_footer_branch
      %15 = sbr.rel target = $region3
    $region8: #{tpu_custom_call.1} parent=1 // loop_exit
      _
    %468 = vsyncpa [#allocation3], 1
    %s469 = scalar_lea.sflag [#allocation3], 1
    %470 = vsyncpa %s469, 1
    %471 = vsyncpa [#allocation6], 1
    %472 = vsyncpa [#allocation4], 1
    %s473 = scalar_lea.sflag [#allocation4], 1
    %474 = vsyncpa %s473, 1

</llo_original>
